<compile_context>
chip_gen: v7x
topology: tpu7x:2x2x1
jax: 0.10.0
libtpu: 0.0.40
codegen_flags: <defaults>
</compile_context>

<pallas_src>
import jax
import jax.numpy as jnp
from jax.experimental import pallas as pl
from jax.experimental.pallas import tpu as pltpu


def _normalize_kernel(x_ref, scale_ref, shift_ref, o_ref):
    # x_ref: (tile_rows, C*H*W); scale/shift: (1, C*H*W), broadcast over sublanes.
    y = x_ref[...].astype(jnp.float32) * scale_ref[...] + shift_ref[...]
    o_ref[...] = y.astype(o_ref.dtype)


def _pick_tile_rows(rows, cols, target_bytes=1 << 20, min_steps=4):
    """Row tile for the (rows, cols) f32 view.

    Returns a multiple of 8 capped at ~target_bytes per x block AND small
    enough that the grid has >= min_steps steps (pipeline overlap + v7x
    dual-TensorCore sharding). Falls back to full extent when rows < 16
    (the (8,128) rule then requires the full-extent block).
    """
    if rows < 16:
        return rows  # full extent satisfies the (8,128) rule for any row count
    # Cap block size by VMEM/pipelining budget.
    tile = max(8, ((target_bytes // (cols * 4)) // 8) * 8)
    # Cap so the grid has at least min_steps steps.
    max_tile_for_steps = max(8, ((rows // min_steps) // 8) * 8)
    tile = min(tile, max_tile_for_steps)
    # Never exceed the row count (rounded down to a multiple of 8).
    tile = min(tile, (rows // 8) * 8)
    return max(8, tile)


def preprocess_cifar10(x, mean, std, out_dtype=None):
    """y[:, c] = (x[:, c] - mean[c]) / std[c] for NCHW float input.

    out_dtype: optionally emit the result in a narrower dtype (e.g. bf16) to
    halve HBM write traffic for a bf16 downstream model; defaults to x.dtype.
    """
    B, C, H, W = x.shape
    rows = B
    cols = C * H * W
    out_dtype = x.dtype if out_dtype is None else out_dtype

    mean = mean.astype(jnp.float32)
    inv_std = (1.0 / std.astype(jnp.float32))

    # Single lane-dense affine row in the (B, C*H*W) view (per-channel params
    # repeated over the H*W spatial lanes). DMA'd once, VMEM-resident.
    scale_row = jnp.repeat(inv_std, H * W).reshape(1, cols)
    shift_row = jnp.repeat(-mean * inv_std, H * W).reshape(1, cols)

    x2d = x.reshape(rows, cols)

    tile_rows = _pick_tile_rows(rows, cols)
    grid = (pl.cdiv(rows, tile_rows),)

    in_bytes = rows * cols * x.dtype.itemsize
    out_bytes = rows * cols * jnp.dtype(out_dtype).itemsize
    param_bytes = 2 * cols * 4
    cost = pl.CostEstimate(
        flops=2 * rows * cols,
        transcendentals=0,
        bytes_accessed=in_bytes + out_bytes + param_bytes,
    )

    y2d = pl.pallas_call(
        _normalize_kernel,
        out_shape=jax.ShapeDtypeStruct((rows, cols), out_dtype),
        grid=grid,
        in_specs=[
            pl.BlockSpec((tile_rows, cols), lambda i: (i, 0)),
            pl.BlockSpec((1, cols), lambda i: (0, 0)),  # VMEM-resident across grid
            pl.BlockSpec((1, cols), lambda i: (0, 0)),  # VMEM-resident across grid
        ],
        out_specs=pl.BlockSpec((tile_rows, cols), lambda i: (i, 0)),
        compiler_params=pltpu.CompilerParams(
            dimension_semantics=("parallel",),
        ),
        cost_estimate=cost,
    )(x2d, scale_row, shift_row)

    return y2d.reshape(B, C, H, W)


class WrapperCIFAR10:
    """JAX/Pallas equivalent of lconvnet.external.kw.WrapperCIFAR10."""

    def __init__(self, model=None):
        # TODO(synk): external wrapped model not specified; default to identity.
        self.model = model if model is not None else (lambda x: x)
        self.mean = jnp.array([0.485, 0.456, 0.406], dtype=jnp.float32)
        self.std = jnp.array([0.225, 0.225, 0.225], dtype=jnp.float32)

    def preprocess(self, x):
        return preprocess_cifar10(x, self.mean, self.std)

    def __call__(self, x):
        x = self.preprocess(x)
        return self.model(x)

    def __getitem__(self, item):
        return self.model[item]


def _reference(x):
    mean = jnp.array([0.485, 0.456, 0.406], dtype=jnp.float32).reshape(1, 3, 1, 1)
    std = jnp.array([0.225, 0.225, 0.225], dtype=jnp.float32).reshape(1, 3, 1, 1)
    return (x - mean) / std


if __name__ == "__main__":
    key = jax.random.PRNGKey(0)
    wrapper = WrapperCIFAR10()

    # Small batch: full-extent single-block path.
    B, C, H, W = 2, 3, 16, 16
    x_small = jax.random.uniform(key, (B, C, H, W), dtype=jnp.float32)
    out_small = jax.block_until_ready(wrapper(x_small))
    assert out_small.shape == (B, C, H, W)
    assert jnp.max(jnp.abs(out_small - _reference(x_small))) < 1e-5

    # Larger batch: exercises the multi-step "parallel" grid (>= 4 steps).
    B2 = 32
    x_big = jax.random.uniform(jax.random.PRNGKey(1), (B2, C, H, W), dtype=jnp.float32)
    out_big = jax.block_until_ready(wrapper(x_big))
    assert out_big.shape == (B2, C, H, W)
    assert jnp.max(jnp.abs(out_big - _reference(x_big))) < 1e-5

    print("KERNEL_OK")
</pallas_src>

<mosaic_0001>
module attributes {stable_mosaic.version = 11 : i64} {
  func.func @_normalize_kernel(%arg0: i32, %arg1: memref<2x768xf32, #tpu.memory_space<vmem>>, %arg2: memref<1x768xf32, #tpu.memory_space<vmem>>, %arg3: memref<1x768xf32, #tpu.memory_space<vmem>>, %arg4: memref<2x768xf32, #tpu.memory_space<vmem>>) attributes {dimension_semantics = [#tpu.dimension_semantics<parallel>], iteration_bounds = array<i64: 1>, scalar_prefetch = 0 : i64, scratch_operands = 0 : i64, tpu.core_type = #tpu.core_type<tc>, window_params = [{transform_indices = @transform_0, window_bounds = array<i64: 2, 768>}, {pipeline_mode = #tpu.pipeline_mode<synchronous>, transform_indices = @transform_1, window_bounds = array<i64: 1, 768>}, {pipeline_mode = #tpu.pipeline_mode<synchronous>, transform_indices = @transform_2, window_bounds = array<i64: 1, 768>}, {transform_indices = @transform_3, window_bounds = array<i64: 2, 768>}]} {
    %c0 = arith.constant 0 : index
    %c0_0 = arith.constant 0 : index
    %0 = vector.load %arg1[%c0, %c0_0] : memref<2x768xf32, #tpu.memory_space<vmem>>, vector<2x768xf32>
    %c0_1 = arith.constant 0 : index
    %c0_2 = arith.constant 0 : index
    %1 = vector.load %arg2[%c0_1, %c0_2] : memref<1x768xf32, #tpu.memory_space<vmem>>, vector<1x768xf32>
    %2 = vector.broadcast %1 : vector<1x768xf32> to vector<2x768xf32>
    %3 = arith.mulf %0, %2 : vector<2x768xf32>
    %c0_3 = arith.constant 0 : index
    %c0_4 = arith.constant 0 : index
    %4 = vector.load %arg3[%c0_3, %c0_4] : memref<1x768xf32, #tpu.memory_space<vmem>>, vector<1x768xf32>
    %5 = vector.broadcast %4 : vector<1x768xf32> to vector<2x768xf32>
    %6 = arith.addf %3, %5 : vector<2x768xf32>
    %c0_5 = arith.constant 0 : index
    %c0_6 = arith.constant 0 : index
    %7 = vector.load %arg4[%c0_5, %c0_6] : memref<2x768xf32, #tpu.memory_space<vmem>>, vector<2x768xf32>
    tpu.vector_store %arg4[%c0_5, %c0_6], %6 {strides = array<i32>} : memref<2x768xf32, #tpu.memory_space<vmem>>, vector<2x768xf32>,
    return
  }
  func.func @transform_0(%arg0: i32) -> (i32, i32) {
    %c0_i32 = arith.constant 0 : i32
    %c0_i32_0 = arith.constant 0 : i32
    return %arg0, %c0_i32 : i32, i32
  }
  func.func @transform_1(%arg0: i32) -> (i32, i32) {
    %c0_i32 = arith.constant 0 : i32
    %c0_i32_0 = arith.constant 0 : i32
    %c0_i32_1 = arith.constant 0 : i32
    return %c0_i32, %c0_i32_0 : i32, i32
  }
  func.func @transform_2(%arg0: i32) -> (i32, i32) {
    %c0_i32 = arith.constant 0 : i32
    %c0_i32_0 = arith.constant 0 : i32
    %c0_i32_1 = arith.constant 0 : i32
    return %c0_i32, %c0_i32_0 : i32, i32
  }
  func.func @transform_3(%arg0: i32) -> (i32, i32) {
    %c0_i32 = arith.constant 0 : i32
    %c0_i32_0 = arith.constant 0 : i32
    return %arg0, %c0_i32 : i32, i32
  }
}

</mosaic_0001>

<llo_original>
// kernel: tpu_custom_call.1
$region0: #{tpu_custom_call.1}
  #allocation0 [shape = 'u32[]', space=smem, size = 0x4, offset = 0x4, fixed_abs, tag = 'smem constant byte address 0x4 - core index']
  #allocation1 [shape = 'u32[144,128]{1,0:T(1,128)}', space=vmem, size = 0x12000, scoped, tag = 'internal scratch']
  %s0 = inlined_call_operand.hbm [shape: f32[2,768], index: 0, kind: input, shape index: {}]
  %s1 = inlined_call_operand.hbm [shape: f32[1,768], index: 1, kind: input, shape index: {}]
  %s2 = inlined_call_operand.vmem [shape: f32[1,768], index: 2, kind: input, shape index: {}]
  %s3 = inlined_call_operand.hbm [shape: f32[2,768], index: 3, kind: output, shape index: {}]
  %s4 = sld [smem:[#allocation0]]
  $region30: #{tpu_custom_call.1} parent=0
    _
  %s6 = ssub.s32 1, %s4
  %s7 = scalar_select 0, %s6, %s4
  $region1: #{tpu_custom_call.1} parent=0
    #allocation2 [shape = 'u8[6144]{0}', space=vmem, size = 0x1800, scoped, tag = 'input window, operand 0, single buffered']
    #allocation3 [shape = 's32[1]{0}', space=sflag, size = 0x4, scoped, tag = 'scoped memory for tpu_custom_call.1']
    #allocation4 [shape = 's32[1]{0}', space=sflag, size = 0x4, scoped, tag = 'scoped memory for tpu_custom_call.1']
    #allocation5 [shape = 'u8[3072]{0}', space=vmem, size = 0xc00, scoped, tag = 'input window, operand 1, single buffered']
    #allocation6 [shape = 's32[1]{0}', space=sflag, size = 0x4, scoped, tag = 'scoped memory for tpu_custom_call.1']
    #allocation7 [shape = 'u8[6144]{0}', space=vmem, size = 0x1800, scoped, tag = 'output window, operand 0, single buffered']
    %8 = vsyncpa [#allocation3], 0
    %9 = vsyncpa [#allocation6], 0
    %10 = vsyncpa [#allocation4], 0
    // Predicated region
    $region2: #{tpu_custom_call.1} parent=1 // pred_check
      _
    $region3: #{tpu_custom_call.1} parent=1 // pred_check_branch
      %12 = sbr.rel (0) target = $region5
    $region4: #{tpu_custom_call.1} parent=1 // pred_region
      %s14 = ssub.s32 192, 192
      %15 = vsyncadd [#allocation3], %s14
      %s17 = sshll.u32 [#allocation2], 4
      %s18 = int_to_ptr.vmem [resolvable:$true] %s17
      %20 = dma.hbm_to_vmem [thread:$0]  %s0, 192, %s18, [#allocation3]
    $region5: #{tpu_custom_call.1} parent=1 // pred_fallthru
      _
    // Predicated region
    $region6: #{tpu_custom_call.1} parent=1 // pred_check
      _
    $region7: #{tpu_custom_call.1} parent=1 // pred_check_branch
      %22 = sbr.rel (0) target = $region9
    $region8: #{tpu_custom_call.1} parent=1 // pred_region
      %s24 = ssub.s32 96, 96
      %25 = vsyncadd [#allocation6], %s24
      %s27 = sshll.u32 [#allocation5], 4
      %s28 = int_to_ptr.vmem [resolvable:$true] %s27
      %30 = dma.hbm_to_vmem [thread:$0]  %s1, 96, %s28, [#allocation6]
    $region9: #{tpu_custom_call.1} parent=1 // pred_fallthru
      _
    // Predicated region
    $region10: #{tpu_custom_call.1} parent=1 // pred_check
      _
    $region11: #{tpu_custom_call.1} parent=1 // pred_check_branch
      %32 = sbr.rel (0) target = $region13
    $region12: #{tpu_custom_call.1} parent=1 // pred_region
      _
    $region13: #{tpu_custom_call.1} parent=1 // pred_fallthru
      _
    // Predicated region
    $region14: #{tpu_custom_call.1} parent=1 // pred_check
      _
    $region15: #{tpu_custom_call.1} parent=1 // pred_check_branch
      %34 = sbr.rel (0) target = $region17
    $region16: #{tpu_custom_call.1} parent=1 // pred_region
      %35 = dma.done [#allocation3], 192
    $region17: #{tpu_custom_call.1} parent=1 // pred_fallthru
      _
    // Predicated region
    $region18: #{tpu_custom_call.1} parent=1 // pred_check
      _
    $region19: #{tpu_custom_call.1} parent=1 // pred_check_branch
      %37 = sbr.rel (0) target = $region21
    $region20: #{tpu_custom_call.1} parent=1 // pred_region
      %38 = dma.done [#allocation6], 96
    $region21: #{tpu_custom_call.1} parent=1 // pred_fallthru
      _
    %v39 = vld [vmem:[#allocation2] sm:$0xff]
    %v40 = vld [vmem:[#allocation2 + $0x8] sm:$0xf]
    %v41 = vld [vmem:[#allocation5] sm:$0x3f]
    %v43 = vlaneseq
    %v44 = vshrl.u32 %v43, 7
    %v45 = vsub.s32 0, %v44
    %v46 = vrot.slane %v41, %v45
    %v47 = vlaneseq
    %v48 = vshrl.u32 %v47, 7
    %v49 = vsub.s32 1, %v48
    %v50 = vrot.slane %v41, %v49
    %v51 = vlaneseq
    %v52 = vshrl.u32 %v51, 7
    %v53 = vsub.s32 2, %v52
    %v54 = vrot.slane %v41, %v53
    %v55 = vlaneseq
    %v56 = vshrl.u32 %v55, 7
    %v57 = vsub.s32 3, %v56
    %v58 = vrot.slane %v41, %v57
    %v59 = vlaneseq
    %v60 = vshrl.u32 %v59, 7
    %v61 = vsub.s32 4, %v60
    %v62 = vrot.slane %v41, %v61
    %v63 = vlaneseq
    %v64 = vshrl.u32 %v63, 7
    %v65 = vsub.s32 5, %v64
    %v66 = vrot.slane %v41, %v65
    %v67 = vcombine.low %v46, %v50
    %v68 = vcombine.low %v54, %v58
    %v70 = vunpack.c.l.s4 1983009808
    %v71 = vunpack.c.0.s8 %v70
    %v72 = vlaneseq
    %v73 = vshrl.u32 %v72, 7
    %v74 = vsub.s32 %v71, %v73
    %v75 = vrot.slane %v67, %v74
    %v77 = vunpack.c.l.s4 1983009808
    %v78 = vunpack.c.0.s8 %v77
    %v79 = vlaneseq
    %v80 = vshrl.u32 %v79, 7
    %v81 = vsub.s32 %v78, %v80
    %v82 = vrot.slane %v68, %v81
    %v83 = vcombine.low %v75, %v82
    %v84 = vcombine.low %v62, %v66
    %v86 = vunpack.c.l.s4 1983009808
    %v87 = vunpack.c.0.s8 %v86
    %v88 = vlaneseq
    %v89 = vshrl.u32 %v88, 7
    %v90 = vsub.s32 %v87, %v89
    %v91 = vrot.slane %v84, %v90
    %v94 = vmul.f32 %v39, %v83
    %v95 = vmul.f32 %v40, %v91
    %v96 = vld [vmem:[%s2] sm:$0x3f]
    %v98 = vlaneseq
    %v99 = vshrl.u32 %v98, 7
    %v100 = vsub.s32 0, %v99
    %v101 = vrot.slane %v96, %v100
    %v102 = vlaneseq
    %v103 = vshrl.u32 %v102, 7
    %v104 = vsub.s32 1, %v103
    %v105 = vrot.slane %v96, %v104
    %v106 = vlaneseq
    %v107 = vshrl.u32 %v106, 7
    %v108 = vsub.s32 2, %v107
    %v109 = vrot.slane %v96, %v108
    %v110 = vlaneseq
    %v111 = vshrl.u32 %v110, 7
    %v112 = vsub.s32 3, %v111
    %v113 = vrot.slane %v96, %v112
    %v114 = vlaneseq
    %v115 = vshrl.u32 %v114, 7
    %v116 = vsub.s32 4, %v115
    %v117 = vrot.slane %v96, %v116
    %v118 = vlaneseq
    %v119 = vshrl.u32 %v118, 7
    %v120 = vsub.s32 5, %v119
    %v121 = vrot.slane %v96, %v120
    %v122 = vcombine.low %v101, %v105
    %v123 = vcombine.low %v109, %v113
    %v125 = vunpack.c.l.s4 1983009808
    %v126 = vunpack.c.0.s8 %v125
    %v127 = vlaneseq
    %v128 = vshrl.u32 %v127, 7
    %v129 = vsub.s32 %v126, %v128
    %v130 = vrot.slane %v122, %v129
    %v132 = vunpack.c.l.s4 1983009808
    %v133 = vunpack.c.0.s8 %v132
    %v134 = vlaneseq
    %v135 = vshrl.u32 %v134, 7
    %v136 = vsub.s32 %v133, %v135
    %v137 = vrot.slane %v123, %v136
    %v138 = vcombine.low %v130, %v137
    %v139 = vcombine.low %v117, %v121
    %v141 = vunpack.c.l.s4 1983009808
    %v142 = vunpack.c.0.s8 %v141
    %v143 = vlaneseq
    %v144 = vshrl.u32 %v143, 7
    %v145 = vsub.s32 %v142, %v144
    %v146 = vrot.slane %v139, %v145
    %v149 = vadd.f32 %v94, %v138
    %v150 = vadd.f32 %v95, %v146
    %151 = vst [vmem:[#allocation7] sm:$0xff] %v149
    %152 = vst [vmem:[#allocation7 + $0x8] sm:$0xf] %v150
    // Predicated region
    $region22: #{tpu_custom_call.1} parent=1 // pred_check
      _
    $region23: #{tpu_custom_call.1} parent=1 // pred_check_branch
      %154 = sbr.rel (0) target = $region25
    $region24: #{tpu_custom_call.1} parent=1 // pred_region
      %s156 = ssub.s32 192, 192
      %157 = vsyncadd [#allocation4], %s156
      %s159 = sshll.u32 [#allocation7], 4
      %s160 = int_to_ptr.vmem [resolvable:$true] %s159
      %162 = dma.vmem_to_hbm [thread:$0]  %s160, 192, %s3, [#allocation4]
    $region25: #{tpu_custom_call.1} parent=1 // pred_fallthru
      _
    // Predicated region
    $region26: #{tpu_custom_call.1} parent=1 // pred_check
      _
    $region27: #{tpu_custom_call.1} parent=1 // pred_check_branch
      %164 = sbr.rel (0) target = $region29
    $region28: #{tpu_custom_call.1} parent=1 // pred_region
      %165 = dma.done [#allocation4], 192
    $region29: #{tpu_custom_call.1} parent=1 // pred_fallthru
      _
    %166 = vsyncpa [#allocation3], 1
    %167 = vsyncpa [#allocation6], 1
    %168 = vsyncpa [#allocation4], 1

</llo_original>
